<compile_context>
chip_gen: v7x
topology: tpu7x:2x2x1
jax: 0.10.0
libtpu: 0.0.40
codegen_flags: <defaults>
</compile_context>

<pallas_src>
import functools
import math

import jax
import jax.numpy as jnp
from jax.experimental import pallas as pl
from jax.experimental.pallas import tpu as pltpu

LANE = 128  # TPU lane width; channel dims are padded to this.


# ---------------------------------------------------------------------------
# Pallas kernel: per-tensor asymmetric fake quantization (runs ONCE per weight
# at preparation time, hoisted out of the per-step forward).
# ---------------------------------------------------------------------------
def _fakequant_kernel(scale_ref, zp_ref, w_ref, o_ref, *, n_bits):
    s = scale_ref[0]
    zp = zp_ref[0]
    qmax = float(2 ** n_bits - 1)
    q = jnp.clip(jnp.round(w_ref[...] / s) + zp, 0.0, qmax)
    o_ref[...] = (q - zp) * s


def pallas_fakequant(w2d, n_bits):
    """Per-tensor min/max fake quantization of a 2-D weight matrix.
    # TODO(synk): per-output-channel scales (common in diffusion PTQ) are not
    # implemented; per-tensor is used as in this stub."""
    w2d = w2d.astype(jnp.float32)
    qmax = float(2 ** n_bits - 1)
    wmin = jnp.minimum(jnp.min(w2d), 0.0)
    wmax = jnp.maximum(jnp.max(w2d), 0.0)
    scale = jnp.maximum((wmax - wmin) / qmax, 1e-8)
    zp = jnp.clip(jnp.round(-wmin / scale), 0.0, qmax)
    O, K = w2d.shape
    return pl.pallas_call(
        functools.partial(_fakequant_kernel, n_bits=n_bits),
        out_shape=jax.ShapeDtypeStruct((O, K), jnp.float32),
        grid=(1,),
        in_specs=[
            pl.BlockSpec(memory_space=pltpu.MemorySpace.SMEM),
            pl.BlockSpec(memory_space=pltpu.MemorySpace.SMEM),
            pl.BlockSpec((O, K), lambda i: (0, 0)),
        ],
        out_specs=pl.BlockSpec((O, K), lambda i: (0, 0)),
    )(scale.reshape(1), zp.reshape(1), w2d)


# ---------------------------------------------------------------------------
# Fused per-step forward kernel:
#   temb MLP (modules 1+3)  ->  conv_in (module 2, +bias +temb +SiLU)
#   -> conv_mid (module 4, per-timestep effective weight, +bias +SiLU)
#   -> conv_out (module 5, +bias, no activation)
# All halos live in bf16 VMEM scratch; one MXU dot per conv (K packed = 9*128).
# ---------------------------------------------------------------------------
def _fused_step_kernel(t_idx_ref, temb_ref, x_ref, w1_ref, w3_ref, bmlp_ref,
                       w2_ref, w4_ref, w5_ref, bconv_ref, o_ref, buf0, buf1):
    del t_idx_ref  # only consumed by the module-4 weight BlockSpec index_map
    N, H, W, C = x_ref.shape
    M = N * H * W

    # ---- modules 1 + 3: timestep-embedding MLP (Linear -> SiLU -> Linear) ---
    g = jnp.dot(temb_ref[...].astype(jnp.bfloat16), w1_ref[...],
                preferred_element_type=jnp.float32) + bmlp_ref[0:1, :]
    g = g * jax.nn.sigmoid(g)
    g = jnp.dot(g.astype(jnp.bfloat16), w3_ref[...],
                preferred_element_type=jnp.float32) + bmlp_ref[1:2, :]
    temb_out = g[:N]                                        # (N, C) f32

    # ---- zero-halo buffers; write the input image into buf0's interior ------
    buf0[...] = jnp.zeros_like(buf0)
    buf1[...] = jnp.zeros_like(buf1)
    buf0[:, 1:H + 1, 1:W + 1, :] = x_ref[...].astype(jnp.bfloat16)

    def conv3x3(src_ref, w_packed_ref, bias_row, temb_add, apply_silu):
        # 3 sublane-shifted (dj) bf16 views; H (di) slices of those are cheap.
        xdj = [src_ref[:, :, dj:dj + W, :] for dj in range(3)]
        xk = jnp.concatenate(
            [xdj[dj][:, di:di + H, :, :].reshape(M, C)
             for dj in range(3) for di in range(3)], axis=-1)  # (M, 9C) bf16
        acc = jnp.dot(xk, w_packed_ref[...],
                      preferred_element_type=jnp.float32)      # single MXU pass
        acc = acc + bias_row                                    # (1, C) broadcast
        if temb_add is not None:
            acc = (acc.reshape(N, H * W, C) + temb_add[:, None, :]).reshape(M, C)
        if apply_silu:
            acc = acc * jax.nn.sigmoid(acc)
        return acc

    # ---- module 2: conv_in + bias + temb broadcast-add + SiLU ---------------
    h = conv3x3(buf0, w2_ref, bconv_ref[0:1, :], temb_out, True)
    buf1[:, 1:H + 1, 1:W + 1, :] = h.reshape(N, H, W, C).astype(jnp.bfloat16)

    # ---- module 4: QuantModule_intnlora conv (LoRA pre-folded per timestep) -
    h = conv3x3(buf1, w4_ref, bconv_ref[1:2, :], None, True)
    buf0[:, 1:H + 1, 1:W + 1, :] = h.reshape(N, H, W, C).astype(jnp.bfloat16)

    # ---- module 5: last module (8-bit) conv_out, no activation --------------
    h = conv3x3(buf0, w5_ref, bconv_ref[2:3, :], None, False)
    o_ref[...] = h.reshape(N, H, W, C)


# ---------------------------------------------------------------------------
# JAX glue: timestep embedding, parameter construction, one-time preparation
# ---------------------------------------------------------------------------
def timestep_embedding(t, dim):
    half = dim // 2
    freqs = jnp.exp(-math.log(10000.0) * jnp.arange(half, dtype=jnp.float32) / half)
    args = t.astype(jnp.float32)[:, None] * freqs[None, :]
    return jnp.concatenate([jnp.cos(args), jnp.sin(args)], axis=-1)


def make_params(key, c_in=4, hidden=32, temb_dim=128, num_steps=20, rank=4):
    ks = jax.random.split(key, 12)

    def w(k, shape, s=0.05):
        return (s * jax.random.normal(k, shape)).astype(jnp.float32)

    return {
        # module 1 (special, 8-bit): temb Linear(temb_dim -> temb_dim)
        "w1": w(ks[0], (temb_dim, temb_dim)), "b1": w(ks[1], (temb_dim,)),
        # module 2 (special, 8-bit): conv_in Conv2d(c_in -> hidden, 3, pad 1)
        "w2": w(ks[2], (hidden, c_in, 3, 3)), "b2": w(ks[3], (hidden,)),
        # module 3 (special, 8-bit): temb_proj Linear(temb_dim -> hidden)
        "w3": w(ks[4], (hidden, temb_dim)), "b3": w(ks[5], (hidden,)),
        # module 4 (QuantModule_intnlora, 4-bit + per-timestep LoRA): conv_mid
        "w4": w(ks[6], (hidden, hidden, 3, 3)), "b4": w(ks[7], (hidden,)),
        "lora_A": w(ks[8], (num_steps, rank, hidden * 9), 0.02),
        "lora_B": w(ks[9], (num_steps, hidden, rank), 0.02),
        # module 5 (last -> special, 8-bit): conv_out Conv2d(hidden -> c_in)
        "w5": w(ks[10], (c_in, hidden, 3, 3)), "b5": w(ks[11], (c_in,)),
    }


def _conv_w_to_packed(w2d, cin, cout):
    """(Cout, Cin*9) -> (9*LANE, LANE) bf16, rows ordered (dj, di, cin)."""
    w = w2d.reshape(cout, cin, 3, 3)
    w = jnp.transpose(w, (3, 2, 1, 0))                     # (dj, di, cin, cout)
    w = jnp.pad(w, ((0, 0), (0, 0), (0, LANE - cin), (0, LANE - cout)))
    return w.reshape(9 * LANE, LANE).astype(jnp.bfloat16)


def prepare_quant_params(params, *, lora_scale):
    """One-time preparation hoisted out of the sampling loop: fake-quantize all
    t-independent weights, fold the LoRA delta into per-timestep effective
    module-4 weights, and pack everything into lane-padded K-packed layouts."""
    hidden, c_in = params["w2"].shape[0], params["w2"].shape[1]
    temb_dim = params["w1"].shape[0]

    w1_eff = pallas_fakequant(params["w1"], 8)                              # 8-bit
    w2_eff = pallas_fakequant(params["w2"].reshape(hidden, c_in * 9), 8)    # 8-bit
    w3_eff = pallas_fakequant(params["w3"], 8)                              # 8-bit
    w4_deq = pallas_fakequant(params["w4"].reshape(hidden, hidden * 9), 4)  # 4-bit
    w5_eff = pallas_fakequant(params["w5"].reshape(c_in, hidden * 9), 8)    # 8-bit

    # Effective module-4 weights for ALL timesteps (per-step kernel only DMAs
    # the selected slice via scalar-prefetch index_map).
    # TODO(synk): reference ordering assumed quantize(W) + lora_delta; if the
    # PyTorch module quantizes (W + delta) per step, this hoist differs.
    delta = jnp.einsum("sor,srk->sok", params["lora_B"], params["lora_A"])
    w4_all = w4_deq[None] + lora_scale * delta            # (S, hidden, hidden*9)

    pack44 = functools.partial(_conv_w_to_packed, cin=hidden, cout=hidden)
    return {
        "w1_t": w1_eff.T.astype(jnp.bfloat16),                       # (D, D)
        "w3_t": jnp.pad(w3_eff.T, ((0, 0), (0, LANE - hidden))).astype(jnp.bfloat16),
        "bias_mlp": jnp.stack([
            jnp.pad(params["b1"], (0, LANE - temb_dim)),
            jnp.pad(params["b3"], (0, LANE - hidden))]).astype(jnp.float32),
        "w2_packed": _conv_w_to_packed(w2_eff, c_in, hidden),        # (1152, 128)
        "w4_packed_all": jax.vmap(pack44)(w4_all),                   # (S, 1152, 128)
        "w5_packed": _conv_w_to_packed(w5_eff, hidden, c_in),        # (1152, 128)
        "bias_conv": jnp.stack([
            jnp.pad(params["b2"], (0, LANE - hidden)),
            jnp.pad(params["b4"], (0, LANE - hidden)),
            jnp.pad(params["b5"], (0, LANE - c_in))]).astype(jnp.float32),
    }


# ---------------------------------------------------------------------------
# Per-step forward of the refactored (quantized) model — ONE pallas_call.
# ---------------------------------------------------------------------------
def quant_model_intnlora_forward(prep, image, t, *, num_steps, temb_dim=128):
    N, C, H, W = image.shape
    Np = ((N + 7) // 8) * 8

    temb = timestep_embedding(t, temb_dim)                              # (N, D)
    temb = jnp.pad(temb, ((0, Np - N), (0, LANE - temb_dim)))

    x = jnp.transpose(image, (0, 2, 3, 1)).astype(jnp.float32)
    x = jnp.pad(x, ((0, 0), (0, 0), (0, 0), (0, LANE - C)))     # (N, H, W, 128)

    # TODO(synk): exact timestep -> LoRA-slot mapping of QuantModule_intnlora is
    # not available; use the (shared) first timestep clipped to [0, num_steps).
    t_idx = jnp.clip(t[0].astype(jnp.int32), 0, num_steps - 1).reshape(1)

    grid_spec = pltpu.PrefetchScalarGridSpec(
        num_scalar_prefetch=1,
        grid=(1,),
        in_specs=[
            pl.BlockSpec((Np, LANE), lambda i, ti: (0, 0)),              # temb
            pl.BlockSpec((N, H, W, LANE), lambda i, ti: (0, 0, 0, 0)),   # x
            pl.BlockSpec((LANE, LANE), lambda i, ti: (0, 0)),            # w1^T
            pl.BlockSpec((LANE, LANE), lambda i, ti: (0, 0)),            # w3^T
            pl.BlockSpec((2, LANE), lambda i, ti: (0, 0)),               # b1, b3
            pl.BlockSpec((9 * LANE, LANE), lambda i, ti: (0, 0)),        # w2 packed
            pl.BlockSpec((None, 9 * LANE, LANE),
                         lambda i, ti: (ti[0], 0, 0)),                   # w4_eff[t]
            pl.BlockSpec((9 * LANE, LANE), lambda i, ti: (0, 0)),        # w5 packed
            pl.BlockSpec((3, LANE), lambda i, ti: (0, 0)),               # b2, b4, b5
        ],
        out_specs=pl.BlockSpec((N, H, W, LANE), lambda i, ti: (0, 0, 0, 0)),
        scratch_shapes=[
            pltpu.VMEM((N, H + 2, W + 2, LANE), jnp.bfloat16),
            pltpu.VMEM((N, H + 2, W + 2, LANE), jnp.bfloat16),
        ],
    )

    out = pl.pallas_call(
        _fused_step_kernel,
        out_shape=jax.ShapeDtypeStruct((N, H, W, LANE), jnp.float32),
        grid_spec=grid_spec,
        compiler_params=pltpu.CompilerParams(
            dimension_semantics=("arbitrary",),
            vmem_limit_bytes=32 * 1024 * 1024),
    )(t_idx, temb, x, prep["w1_t"], prep["w3_t"], prep["bias_mlp"],
      prep["w2_packed"], prep["w4_packed_all"], prep["w5_packed"],
      prep["bias_conv"])

    return jnp.transpose(out[..., :C], (0, 3, 1, 2))                # (N, C, H, W)


# ---------------------------------------------------------------------------
if __name__ == "__main__":
    key = jax.random.PRNGKey(0)
    k_par, k_img = jax.random.split(key)

    N, C, H, W = 2, 4, 16, 16
    num_steps, rank, temb_dim = 20, 4, 128
    lora_alpha = 8.0

    params = make_params(k_par, c_in=C, hidden=32, temb_dim=temb_dim,
                         num_steps=num_steps, rank=rank)

    # One-time weight preparation (hoisted out of the DDIM sampling loop).
    prep = prepare_quant_params(params, lora_scale=lora_alpha / rank)
    prep = jax.tree_util.tree_map(jax.block_until_ready, prep)

    image = jax.random.normal(k_img, (N, C, H, W), dtype=jnp.float32)
    t = jnp.array([7, 7], dtype=jnp.int32)     # DDIM-style shared timestep

    fwd = jax.jit(functools.partial(quant_model_intnlora_forward,
                                    num_steps=num_steps, temb_dim=temb_dim))
    out = fwd(prep, image, t)
    jax.block_until_ready(out)

    assert out.shape == (N, C, H, W) and out.dtype == jnp.float32
    assert bool(jnp.all(jnp.isfinite(out)))
    print("KERNEL_OK")
</pallas_src>

<mosaic_0001>
module attributes {stable_mosaic.version = 11 : i64} {
  func.func @_fakequant_kernel(%arg0: i32, %arg1: memref<1xf32, #tpu.memory_space<smem>>, %arg2: memref<1xf32, #tpu.memory_space<smem>>, %arg3: memref<128x128xf32, #tpu.memory_space<vmem>>, %arg4: memref<128x128xf32, #tpu.memory_space<vmem>>) attributes {dimension_semantics = [#tpu.dimension_semantics<arbitrary>], iteration_bounds = array<i64: 1>, scalar_prefetch = 0 : i64, scratch_operands = 0 : i64, tpu.core_type = #tpu.core_type<tc>, window_params = [{transform_indices = @transform_0, window_bounds = array<i64: 1>}, {transform_indices = @transform_1, window_bounds = array<i64: 1>}, {pipeline_mode = #tpu.pipeline_mode<synchronous>, transform_indices = @transform_2, window_bounds = array<i64: 128, 128>}, {pipeline_mode = #tpu.pipeline_mode<synchronous>, transform_indices = @transform_3, window_bounds = array<i64: 128, 128>}]} {
    %c0 = arith.constant 0 : index
    %0 = memref.load %arg1[%c0] : memref<1xf32, #tpu.memory_space<smem>>
    %c0_0 = arith.constant 0 : index
    %1 = memref.load %arg2[%c0_0] : memref<1xf32, #tpu.memory_space<smem>>
    %c0_1 = arith.constant 0 : index
    %c0_2 = arith.constant 0 : index
    %2 = vector.load %arg3[%c0_1, %c0_2] : memref<128x128xf32, #tpu.memory_space<vmem>>, vector<128x128xf32>
    %3 = vector.broadcast %0 : f32 to vector<128x128xf32>
    %4 = arith.divf %2, %3 : vector<128x128xf32>
    %5 = math.roundeven %4 : vector<128x128xf32>
    %6 = vector.broadcast %1 : f32 to vector<128x128xf32>
    %7 = arith.addf %5, %6 : vector<128x128xf32>
    %cst = arith.constant 0.000000e+00 : f32
    %cst_3 = arith.constant 2.550000e+02 : f32
    %8 = vector.broadcast %cst : f32 to vector<128x128xf32>
    %9 = arith.maximumf %8, %7 : vector<128x128xf32>
    %10 = vector.broadcast %cst_3 : f32 to vector<128x128xf32>
    %11 = arith.minimumf %10, %9 : vector<128x128xf32>
    %12 = vector.broadcast %1 : f32 to vector<128x128xf32>
    %13 = arith.subf %11, %12 : vector<128x128xf32>
    %14 = vector.broadcast %0 : f32 to vector<128x128xf32>
    %15 = arith.mulf %13, %14 : vector<128x128xf32>
    %c0_4 = arith.constant 0 : index
    %c0_5 = arith.constant 0 : index
    %16 = vector.load %arg4[%c0_4, %c0_5] : memref<128x128xf32, #tpu.memory_space<vmem>>, vector<128x128xf32>
    tpu.vector_store %arg4[%c0_4, %c0_5], %15 {strides = array<i32>} : memref<128x128xf32, #tpu.memory_space<vmem>>, vector<128x128xf32>,
    return
  }
  func.func @transform_0(%arg0: i32) -> i32 {
    %c0_i32 = arith.constant 0 : i32
    %c0_i32_0 = arith.constant 0 : i32
    return %c0_i32 : i32
  }
  func.func @transform_1(%arg0: i32) -> i32 {
    %c0_i32 = arith.constant 0 : i32
    %c0_i32_0 = arith.constant 0 : i32
    return %c0_i32 : i32
  }
  func.func @transform_2(%arg0: i32) -> (i32, i32) {
    %c0_i32 = arith.constant 0 : i32
    %c0_i32_0 = arith.constant 0 : i32
    %c0_i32_1 = arith.constant 0 : i32
    return %c0_i32, %c0_i32_0 : i32, i32
  }
  func.func @transform_3(%arg0: i32) -> (i32, i32) {
    %c0_i32 = arith.constant 0 : i32
    %c0_i32_0 = arith.constant 0 : i32
    %c0_i32_1 = arith.constant 0 : i32
    return %c0_i32, %c0_i32_0 : i32, i32
  }
}

</mosaic_0001>

<llo_original>
// kernel: tpu_custom_call.1
$region0: #{tpu_custom_call.1}
  #allocation0 [shape = 'u32[]', space=smem, size = 0x4, offset = 0x4, fixed_abs, tag = 'smem constant byte address 0x4 - core index']
  #allocation1 [shape = 'u32[144,128]{1,0:T(1,128)}', space=vmem, size = 0x12000, scoped, tag = 'internal scratch']
  #allocation2 [shape = 'f32[1]{0:T(128)S(6)}', space=smem, size = 0x200, scoped, tag = 'scoped memory for tpu_custom_call.1']
  #allocation3 [shape = 'f32[1]{0:T(128)S(6)}', space=smem, size = 0x200, scoped, tag = 'scoped memory for tpu_custom_call.1']
  %s0 = inlined_call_operand.<no memory space> [shape: f32[1], index: 0, kind: input, shape index: {}]
  %s1 = inlined_call_operand.<no memory space> [shape: f32[1], index: 1, kind: input, shape index: {}]
  %s2 = inlined_call_operand.hbm [shape: f32[128,128], index: 2, kind: input, shape index: {}]
  %s3 = inlined_call_operand.hbm [shape: f32[128,128], index: 3, kind: output, shape index: {}]
  %s4 = sld [smem:[#allocation0]]
  $region26: #{tpu_custom_call.1} parent=0
    _
  %s6 = ssub.s32 1, %s4
  %s7 = scalar_select 0, %s6, %s4
  %8 = sst [smem:[#allocation2]] %s0
  %9 = sst [smem:[#allocation3]] %s1
  $region1: #{tpu_custom_call.1} parent=0
    #allocation4 [shape = 'u8[65536]{0}', space=vmem, size = 0x10000, scoped, tag = 'input window, operand 2, single buffered']
    #allocation5 [shape = 's32[1]{0}', space=sflag, size = 0x4, scoped, tag = 'scoped memory for tpu_custom_call.1']
    #allocation6 [shape = 's32[1]{0}', space=sflag, size = 0x4, scoped, tag = 'scoped memory for tpu_custom_call.1']
    #allocation7 [shape = 'u8[65536]{0}', space=vmem, size = 0x10000, scoped, tag = 'output window, operand 0, single buffered']
    %10 = vsyncpa [#allocation5], 0
    %11 = vsyncpa [#allocation6], 0
    // Predicated region
    $region2: #{tpu_custom_call.1} parent=1 // pred_check
      _
    $region3: #{tpu_custom_call.1} parent=1 // pred_check_branch
      %13 = sbr.rel (0) target = $region5
    $region4: #{tpu_custom_call.1} parent=1 // pred_region
      _
    $region5: #{tpu_custom_call.1} parent=1 // pred_fallthru
      _
    // Predicated region
    $region6: #{tpu_custom_call.1} parent=1 // pred_check
      _
    $region7: #{tpu_custom_call.1} parent=1 // pred_check_branch
      %15 = sbr.rel (0) target = $region9
    $region8: #{tpu_custom_call.1} parent=1 // pred_region
      _
    $region9: #{tpu_custom_call.1} parent=1 // pred_fallthru
      _
    // Predicated region
    $region10: #{tpu_custom_call.1} parent=1 // pred_check
      _
    $region11: #{tpu_custom_call.1} parent=1 // pred_check_branch
      %17 = sbr.rel (0) target = $region13
    $region12: #{tpu_custom_call.1} parent=1 // pred_region
      %s19 = ssub.s32 2048, 2048
      %20 = vsyncadd [#allocation5], %s19
      %s21 = sshll.u32 [#allocation4], 4
      %s22 = int_to_ptr.vmem [resolvable:$true] %s21
      %27 = dma.hbm_to_vmem [thread:$0]  %s2, 2048, %s22, [#allocation5], 128, 128, 8
    $region13: #{tpu_custom_call.1} parent=1 // pred_fallthru
      _
    // Predicated region
    $region14: #{tpu_custom_call.1} parent=1 // pred_check
      _
    $region15: #{tpu_custom_call.1} parent=1 // pred_check_branch
      %29 = sbr.rel (0) target = $region17
    $region16: #{tpu_custom_call.1} parent=1 // pred_region
      %30 = dma.done [#allocation5], 2048
    $region17: #{tpu_custom_call.1} parent=1 // pred_fallthru
      _
    %s31 = sld [smem:[#allocation2]]
    %s32 = sld [smem:[#allocation3]]
    %v33 = vld [vmem:[#allocation4] sm:$0xff]
    %v34 = vld [vmem:[#allocation4 + $0x8] sm:$0xff]
    %v35 = vld [vmem:[#allocation4 + $0x10] sm:$0xff]
    %v36 = vld [vmem:[#allocation4 + $0x18] sm:$0xff]
    %v37 = vld [vmem:[#allocation4 + $0x20] sm:$0xff]
    %v38 = vld [vmem:[#allocation4 + $0x28] sm:$0xff]
    %v39 = vld [vmem:[#allocation4 + $0x30] sm:$0xff]
    %v40 = vld [vmem:[#allocation4 + $0x38] sm:$0xff]
    %v41 = vld [vmem:[#allocation4 + $0x40] sm:$0xff]
    %v42 = vld [vmem:[#allocation4 + $0x48] sm:$0xff]
    %v43 = vld [vmem:[#allocation4 + $0x50] sm:$0xff]
    %v44 = vld [vmem:[#allocation4 + $0x58] sm:$0xff]
    %v45 = vld [vmem:[#allocation4 + $0x60] sm:$0xff]
    %v46 = vld [vmem:[#allocation4 + $0x68] sm:$0xff]
    %v47 = vld [vmem:[#allocation4 + $0x70] sm:$0xff]
    %v48 = vld [vmem:[#allocation4 + $0x78] sm:$0xff]
    %v49 = vstv %s31
    %v50 = vrcp.pop %v49
    %v51 = vmul.f32 %v33, %v50
    %v52 = vmul.f32 %v34, %v50
    %v53 = vmul.f32 %v35, %v50
    %v54 = vmul.f32 %v36, %v50
    %v55 = vmul.f32 %v37, %v50
    %v56 = vmul.f32 %v38, %v50
    %v57 = vmul.f32 %v39, %v50
    %v58 = vmul.f32 %v40, %v50
    %v59 = vmul.f32 %v41, %v50
    %v60 = vmul.f32 %v42, %v50
    %v61 = vmul.f32 %v43, %v50
    %v62 = vmul.f32 %v44, %v50
    %v63 = vmul.f32 %v45, %v50
    %v64 = vmul.f32 %v46, %v50
    %v65 = vmul.f32 %v47, %v50
    %v66 = vmul.f32 %v48, %v50
    %v67 = vround.ne.pseudo %v51
    %v68 = vround.ne.pseudo %v52
    %v69 = vround.ne.pseudo %v53
    %v70 = vround.ne.pseudo %v54
    %v71 = vround.ne.pseudo %v55
    %v72 = vround.ne.pseudo %v56
    %v73 = vround.ne.pseudo %v57
    %v74 = vround.ne.pseudo %v58
    %v75 = vround.ne.pseudo %v59
    %v76 = vround.ne.pseudo %v60
    %v77 = vround.ne.pseudo %v61
    %v78 = vround.ne.pseudo %v62
    %v79 = vround.ne.pseudo %v63
    %v80 = vround.ne.pseudo %v64
    %v81 = vround.ne.pseudo %v65
    %v82 = vround.ne.pseudo %v66
    %v83 = vstv %s32
    %v84 = vadd.f32 %v67, %v83
    %v85 = vadd.f32 %v68, %v83
    %v86 = vadd.f32 %v69, %v83
    %v87 = vadd.f32 %v70, %v83
    %v88 = vadd.f32 %v71, %v83
    %v89 = vadd.f32 %v72, %v83
    %v90 = vadd.f32 %v73, %v83
    %v91 = vadd.f32 %v74, %v83
    %v92 = vadd.f32 %v75, %v83
    %v93 = vadd.f32 %v76, %v83
    %v94 = vadd.f32 %v77, %v83
    %v95 = vadd.f32 %v78, %v83
    %v96 = vadd.f32 %v79, %v83
    %v97 = vadd.f32 %v80, %v83
    %v98 = vadd.f32 %v81, %v83
    %v99 = vadd.f32 %v82, %v83
    %v100 = vmax.f32 %v84, 0.0
    %v101 = vmax.f32 %v85, 0.0
    %v102 = vmax.f32 %v86, 0.0
    %v103 = vmax.f32 %v87, 0.0
    %v104 = vmax.f32 %v88, 0.0
    %v105 = vmax.f32 %v89, 0.0
    %v106 = vmax.f32 %v90, 0.0
    %v107 = vmax.f32 %v91, 0.0
    %v108 = vmax.f32 %v92, 0.0
    %v109 = vmax.f32 %v93, 0.0
    %v110 = vmax.f32 %v94, 0.0
    %v111 = vmax.f32 %v95, 0.0
    %v112 = vmax.f32 %v96, 0.0
    %v113 = vmax.f32 %v97, 0.0
    %v114 = vmax.f32 %v98, 0.0
    %v115 = vmax.f32 %v99, 0.0
    %v116 = vmin.f32 %v100, 255.0
    %v117 = vmin.f32 %v101, 255.0
    %v118 = vmin.f32 %v102, 255.0
    %v119 = vmin.f32 %v103, 255.0
    %v120 = vmin.f32 %v104, 255.0
    %v121 = vmin.f32 %v105, 255.0
    %v122 = vmin.f32 %v106, 255.0
    %v123 = vmin.f32 %v107, 255.0
    %v124 = vmin.f32 %v108, 255.0
    %v125 = vmin.f32 %v109, 255.0
    %v126 = vmin.f32 %v110, 255.0
    %v127 = vmin.f32 %v111, 255.0
    %v128 = vmin.f32 %v112, 255.0
    %v129 = vmin.f32 %v113, 255.0
    %v130 = vmin.f32 %v114, 255.0
    %v131 = vmin.f32 %v115, 255.0
    %v132 = vsub.f32 %v116, %v83
    %v133 = vsub.f32 %v117, %v83
    %v134 = vsub.f32 %v118, %v83
    %v135 = vsub.f32 %v119, %v83
    %v136 = vsub.f32 %v120, %v83
    %v137 = vsub.f32 %v121, %v83
    %v138 = vsub.f32 %v122, %v83
    %v139 = vsub.f32 %v123, %v83
    %v140 = vsub.f32 %v124, %v83
    %v141 = vsub.f32 %v125, %v83
    %v142 = vsub.f32 %v126, %v83
    %v143 = vsub.f32 %v127, %v83
    %v144 = vsub.f32 %v128, %v83
    %v145 = vsub.f32 %v129, %v83
    %v146 = vsub.f32 %v130, %v83
    %v147 = vsub.f32 %v131, %v83
    %v148 = vmul.f32 %v132, %v49
    %v149 = vmul.f32 %v133, %v49
    %v150 = vmul.f32 %v134, %v49
    %v151 = vmul.f32 %v135, %v49
    %v152 = vmul.f32 %v136, %v49
    %v153 = vmul.f32 %v137, %v49
    %v154 = vmul.f32 %v138, %v49
    %v155 = vmul.f32 %v139, %v49
    %v156 = vmul.f32 %v140, %v49
    %v157 = vmul.f32 %v141, %v49
    %v158 = vmul.f32 %v142, %v49
    %v159 = vmul.f32 %v143, %v49
    %v160 = vmul.f32 %v144, %v49
    %v161 = vmul.f32 %v145, %v49
    %v162 = vmul.f32 %v146, %v49
    %v163 = vmul.f32 %v147, %v49
    %164 = vst [vmem:[#allocation7] sm:$0xff] %v148
    %165 = vst [vmem:[#allocation7 + $0x8] sm:$0xff] %v149
    %166 = vst [vmem:[#allocation7 + $0x10] sm:$0xff] %v150
    %167 = vst [vmem:[#allocation7 + $0x18] sm:$0xff] %v151
    %168 = vst [vmem:[#allocation7 + $0x20] sm:$0xff] %v152
    %169 = vst [vmem:[#allocation7 + $0x28] sm:$0xff] %v153
    %170 = vst [vmem:[#allocation7 + $0x30] sm:$0xff] %v154
    %171 = vst [vmem:[#allocation7 + $0x38] sm:$0xff] %v155
    %172 = vst [vmem:[#allocation7 + $0x40] sm:$0xff] %v156
    %173 = vst [vmem:[#allocation7 + $0x48] sm:$0xff] %v157
    %174 = vst [vmem:[#allocation7 + $0x50] sm:$0xff] %v158
    %175 = vst [vmem:[#allocation7 + $0x58] sm:$0xff] %v159
    %176 = vst [vmem:[#allocation7 + $0x60] sm:$0xff] %v160
    %177 = vst [vmem:[#allocation7 + $0x68] sm:$0xff] %v161
    %178 = vst [vmem:[#allocation7 + $0x70] sm:$0xff] %v162
    %179 = vst [vmem:[#allocation7 + $0x78] sm:$0xff] %v163
    // Predicated region
    $region18: #{tpu_custom_call.1} parent=1 // pred_check
      _
    $region19: #{tpu_custom_call.1} parent=1 // pred_check_branch
      %181 = sbr.rel (0) target = $region21
    $region20: #{tpu_custom_call.1} parent=1 // pred_region
      %s183 = ssub.s32 2048, 2048
      %184 = vsyncadd [#allocation6], %s183
      %s185 = sshll.u32 [#allocation7], 4
      %s186 = int_to_ptr.vmem [resolvable:$true] %s185
      %191 = dma.vmem_to_hbm [thread:$0]  %s186, 2048, %s3, [#allocation6], 128, 128, 8
    $region21: #{tpu_custom_call.1} parent=1 // pred_fallthru
      _
    // Predicated region
    $region22: #{tpu_custom_call.1} parent=1 // pred_check
      _
    $region23: #{tpu_custom_call.1} parent=1 // pred_check_branch
      %193 = sbr.rel (0) target = $region25
    $region24: #{tpu_custom_call.1} parent=1 // pred_region
      %194 = dma.done [#allocation6], 2048
    $region25: #{tpu_custom_call.1} parent=1 // pred_fallthru
      _
    %195 = vsyncpa [#allocation5], 1
    %196 = vsyncpa [#allocation6], 1

</llo_original>
